<compile_context>
chip_gen: v6e
topology: v6e:2x2x1
jax: 0.10.0
libtpu: 0.0.40
codegen_flags: <defaults>
</compile_context>

<pallas_src>
import functools

import jax
import jax.numpy as jnp
from jax.experimental import pallas as pl
from jax.experimental.pallas import tpu as pltpu

_EPS = 1e-6  # torch F.pairwise_distance default eps (added to the diff)


def _triplet_loss_kernel(a_ref, p_ref, n_ref, o_ref, sq_p_ref, sq_n_ref, *,
                         margin, batch, dim, block_b, block_d,
                         mask_rows, mask_cols):
    i = pl.program_id(0)          # batch tile index
    k = pl.program_id(1)          # embedding-dim tile index (reduction axis)
    nk = pl.num_programs(1)

    @pl.when(k == 0)
    def _init():
        sq_p_ref[...] = jnp.zeros_like(sq_p_ref)
        sq_n_ref[...] = jnp.zeros_like(sq_n_ref)

    # Load (TB, TD) tiles; upcast to f32 only after the (possibly bf16) load.
    a = a_ref[...].astype(jnp.float32)
    p = p_ref[...].astype(jnp.float32)
    n = n_ref[...].astype(jnp.float32)

    # F.pairwise_distance(x, y, p=2) == ||x - y + eps||_2 along the last dim.
    dp = a - p + _EPS
    dn = a - n + _EPS
    sq_p = dp * dp
    sq_n = dn * dn

    if mask_cols:
        # Ragged last D tile: padded columns don't exist in the real tensor.
        col = jax.lax.broadcasted_iota(jnp.int32, sq_p.shape, 1)
        col_valid = (k * block_d + col) < dim
        sq_p = jnp.where(col_valid, sq_p, 0.0)
        sq_n = jnp.where(col_valid, sq_n, 0.0)

    sq_p_ref[...] += jnp.sum(sq_p, axis=-1, keepdims=True)   # (TB, 1)
    sq_n_ref[...] += jnp.sum(sq_n, axis=-1, keepdims=True)   # (TB, 1)

    @pl.when(k == nk - 1)
    def _finalize():
        pos_dist = jnp.sqrt(sq_p_ref[...])
        neg_dist = jnp.sqrt(sq_n_ref[...])
        loss = jnp.maximum(pos_dist - neg_dist + margin, 0.0)  # (TB, 1)
        if mask_rows:
            # Ragged last batch tile: where (not multiply) so garbage/NaN in
            # padded rows cannot poison the sum.
            row = jax.lax.broadcasted_iota(jnp.int32, loss.shape, 0)
            valid = (i * block_b + row) < batch
            loss = jnp.where(valid, loss, 0.0)
        partial = jnp.sum(loss)
        # Zeroed lane-dense block with the partial at [0, 0, 0] so the wrapper
        # finalizes with a single dense reduce (no strided slice).
        r = jax.lax.broadcasted_iota(jnp.int32, o_ref.shape, 1)
        c = jax.lax.broadcasted_iota(jnp.int32, o_ref.shape, 2)
        o_ref[...] = jnp.where((r == 0) & (c == 0), partial,
                               0.0).astype(jnp.float32)


def _round_down(x, m):
    return (x // m) * m


def _round_up(x, m):
    return -(-x // m) * m


def _vmem_limit_bytes():
    """Generation-aware scoped VMEM limit: 96 MiB on v5e/v6e, 48 MiB on v7x."""
    try:
        cap = pltpu.get_tpu_info().vmem_capacity_bytes
    except Exception:
        cap = 64 * 1024 * 1024  # conservative fallback (v7x physical VMEM)
    return min(96 * 1024 * 1024, (int(cap) * 3) // 4)


def _choose_block_b(batch, tb_max, sublane):
    """Pick a batch tile so the grid is >= 2 and even when feasible (v7x megacore)."""
    tb_max = max(sublane, _round_down(tb_max, sublane))
    if batch <= 2 * sublane:
        return batch                              # tiny batch: one full tile
    if batch <= tb_max:
        half = _round_up(-(-batch // 2), sublane)
        return min(half, tb_max)                  # two balanced tiles
    nb = -(-batch // tb_max)
    if nb % 2:
        nb += 1                                   # even tile count
    bb = _round_up(-(-batch // nb), sublane)
    return min(max(bb, sublane), tb_max)


def triplet_loss(anchor, positive, negative, margin=0.2,
                 block_b=None, block_d=None):
    """Pallas TPU implementation of TripletLoss.forward (scalar mean loss)."""
    assert anchor.shape == positive.shape == negative.shape
    assert anchor.ndim == 2
    B, D = anchor.shape

    itemsize = jnp.dtype(anchor.dtype).itemsize
    sublane = max(8, 32 // itemsize)      # 8 for f32, 16 for bf16, 32 for int8

    vmem_limit = _vmem_limit_bytes()
    # Live VMEM per tile element:
    #   3 inputs x 2 pipeline buffers in the storage dtype (streamed bytes)
    # + f32 upcast / diff temporaries (only charged for sub-f32 inputs).
    upcast_extra = 0 if itemsize >= 4 else 5 * 4
    per_elem = 6 * itemsize + max(upcast_extra, 2 * 4)
    tile_budget = (vmem_limit * 3) // 4   # headroom under the scoped limit
    scratch_per_row = 2 * 128 * 4         # two (TB,1) f32 scratches, lane-padded

    # --- embedding-dim tile (reduction axis) --------------------------------
    if block_d is None:
        if per_elem * sublane * D + scratch_per_row * sublane <= tile_budget:
            block_d = D                   # no D tiling needed (common case)
        else:
            block_d = max(128, _round_down(tile_budget // (per_elem * sublane), 128))
    else:
        block_d = min(block_d, D)
        if block_d != D:
            block_d = max(128, _round_down(block_d, 128))
            if block_d >= D:
                block_d = D

    # --- batch tile ----------------------------------------------------------
    if block_b is None:
        tb_vmem = tile_budget // (per_elem * block_d + scratch_per_row)
        tb_target = max(1, (4 * 1024 * 1024) // (block_d * itemsize))  # ~4 MiB/input
        block_b = _choose_block_b(B, min(tb_vmem, tb_target), sublane)
    else:
        block_b = min(block_b, B)
        if block_b != B:
            block_b = max(sublane, _round_down(block_b, sublane))

    grid = (pl.cdiv(B, block_b), pl.cdiv(D, block_d))

    kernel = functools.partial(
        _triplet_loss_kernel,
        margin=float(margin), batch=B, dim=D,
        block_b=block_b, block_d=block_d,
        mask_rows=(B % block_b) != 0,
        mask_cols=(D % block_d) != 0,
    )

    partials = pl.pallas_call(
        kernel,
        out_shape=jax.ShapeDtypeStruct((grid[0], 8, 128), jnp.float32),
        grid=grid,
        in_specs=[
            pl.BlockSpec((block_b, block_d), lambda i, k: (i, k)),
            pl.BlockSpec((block_b, block_d), lambda i, k: (i, k)),
            pl.BlockSpec((block_b, block_d), lambda i, k: (i, k)),
        ],
        out_specs=pl.BlockSpec((1, 8, 128), lambda i, k: (i, 0, 0)),
        scratch_shapes=[
            pltpu.VMEM((block_b, 1), jnp.float32),
            pltpu.VMEM((block_b, 1), jnp.float32),
        ],
        compiler_params=pltpu.CompilerParams(
            dimension_semantics=("parallel", "arbitrary"),
            vmem_limit_bytes=vmem_limit,
        ),
    )(anchor, positive, negative)

    # Partial blocks are zero everywhere except [*, 0, 0] -> one dense reduce.
    return jnp.sum(partials) / B


def _ref_loss(a, p, n, margin):
    a = a.astype(jnp.float32)
    p = p.astype(jnp.float32)
    n = n.astype(jnp.float32)
    pd = jnp.sqrt(jnp.sum((a - p + _EPS) ** 2, axis=-1))
    nd = jnp.sqrt(jnp.sum((a - n + _EPS) ** 2, axis=-1))
    return jnp.mean(jnp.maximum(pd - nd + margin, 0.0))


if __name__ == "__main__":
    key = jax.random.PRNGKey(0)
    k_a, k_p, k_n = jax.random.split(key, 3)

    # Small deterministic example: batch of 8 embeddings of dim 128.
    B, D = 8, 128
    anchor = jax.random.normal(k_a, (B, D), dtype=jnp.float32)
    positive = anchor + 0.1 * jax.random.normal(k_p, (B, D), dtype=jnp.float32)
    negative = jax.random.normal(k_n, (B, D), dtype=jnp.float32)

    loss = triplet_loss(anchor, positive, negative, margin=0.2)
    jax.block_until_ready(loss)
    ref = _ref_loss(anchor, positive, negative, 0.2)
    assert jnp.allclose(loss, ref, rtol=1e-5, atol=1e-5), (loss, ref)

    # Multi-tile batch with ragged last tile (grid[0] = 4, rows masked).
    B2 = 200
    k2a, k2p, k2n = jax.random.split(jax.random.PRNGKey(1), 3)
    a2 = jax.random.normal(k2a, (B2, D), dtype=jnp.float32)
    p2 = a2 + 0.1 * jax.random.normal(k2p, (B2, D), dtype=jnp.float32)
    n2 = jax.random.normal(k2n, (B2, D), dtype=jnp.float32)
    loss2 = triplet_loss(a2, p2, n2, margin=0.2, block_b=64)
    jax.block_until_ready(loss2)
    ref2 = _ref_loss(a2, p2, n2, 0.2)
    assert jnp.allclose(loss2, ref2, rtol=1e-5, atol=1e-5), (loss2, ref2)

    # D-tiled reduction path with ragged D tail + bf16 streaming (upcast in VMEM).
    B3, D3 = 32, 200
    k3a, k3p, k3n = jax.random.split(jax.random.PRNGKey(2), 3)
    a3 = jax.random.normal(k3a, (B3, D3), dtype=jnp.bfloat16)
    p3 = (a3.astype(jnp.float32)
          + 0.1 * jax.random.normal(k3p, (B3, D3))).astype(jnp.bfloat16)
    n3 = jax.random.normal(k3n, (B3, D3), dtype=jnp.bfloat16)
    loss3 = triplet_loss(a3, p3, n3, margin=0.2, block_d=128)
    jax.block_until_ready(loss3)
    ref3 = _ref_loss(a3, p3, n3, 0.2)
    assert jnp.allclose(loss3, ref3, rtol=1e-4, atol=1e-4), (loss3, ref3)

    print("KERNEL_OK")
</pallas_src>

<mosaic_0001>
module attributes {stable_mosaic.version = 11 : i64} {
  func.func @_triplet_loss_kernel(%arg0: i32, %arg1: i32, %arg2: memref<8x128xf32, #tpu.memory_space<vmem>>, %arg3: memref<8x128xf32, #tpu.memory_space<vmem>>, %arg4: memref<8x128xf32, #tpu.memory_space<vmem>>, %arg5: memref<1x8x128xf32, #tpu.memory_space<vmem>>, %arg6: memref<8x1xf32, #tpu.memory_space<vmem>>, %arg7: memref<8x1xf32, #tpu.memory_space<vmem>>) attributes {dimension_semantics = [#tpu.dimension_semantics<parallel>, #tpu.dimension_semantics<arbitrary>], iteration_bounds = array<i64: 1, 1>, scalar_prefetch = 0 : i64, scratch_operands = 2 : i64, tpu.core_type = #tpu.core_type<tc>, window_params = [{transform_indices = @transform_0, window_bounds = array<i64: 8, 128>}, {transform_indices = @transform_1, window_bounds = array<i64: 8, 128>}, {transform_indices = @transform_2, window_bounds = array<i64: 8, 128>}, {transform_indices = @transform_3, window_bounds = array<i64: 1, 8, 128>}]} {
    %c0_i32 = arith.constant 0 : i32
    %0 = arith.cmpi eq, %arg1, %c0_i32 : i32
    %1 = arith.extui %0 : i1 to i32
    %c0_i32_0 = arith.constant 0 : i32
    %2 = arith.cmpi ne, %1, %c0_i32_0 : i32
    scf.if %2 {
      %cst_19 = arith.constant 0.000000e+00 : f32
      %27 = vector.broadcast %cst_19 : f32 to vector<8x1xf32>
      %c0_20 = arith.constant 0 : index
      %c0_21 = arith.constant 0 : index
      %28 = vector.load %arg6[%c0_20, %c0_21] : memref<8x1xf32, #tpu.memory_space<vmem>>, vector<8x1xf32>
      tpu.vector_store %arg6[%c0_20, %c0_21], %27 {strides = array<i32>} : memref<8x1xf32, #tpu.memory_space<vmem>>, vector<8x1xf32>,
      %cst_22 = arith.constant 0.000000e+00 : f32
      %29 = vector.broadcast %cst_22 : f32 to vector<8x1xf32>
      %c0_23 = arith.constant 0 : index
      %c0_24 = arith.constant 0 : index
      %30 = vector.load %arg7[%c0_23, %c0_24] : memref<8x1xf32, #tpu.memory_space<vmem>>, vector<8x1xf32>
      tpu.vector_store %arg7[%c0_23, %c0_24], %29 {strides = array<i32>} : memref<8x1xf32, #tpu.memory_space<vmem>>, vector<8x1xf32>,
    } else {
    }
    %c0 = arith.constant 0 : index
    %c0_1 = arith.constant 0 : index
    %3 = vector.load %arg2[%c0, %c0_1] : memref<8x128xf32, #tpu.memory_space<vmem>>, vector<8x128xf32>
    %c0_2 = arith.constant 0 : index
    %c0_3 = arith.constant 0 : index
    %4 = vector.load %arg3[%c0_2, %c0_3] : memref<8x128xf32, #tpu.memory_space<vmem>>, vector<8x128xf32>
    %c0_4 = arith.constant 0 : index
    %c0_5 = arith.constant 0 : index
    %5 = vector.load %arg4[%c0_4, %c0_5] : memref<8x128xf32, #tpu.memory_space<vmem>>, vector<8x128xf32>
    %6 = arith.subf %3, %4 : vector<8x128xf32>
    %cst = arith.constant 9.99999997E-7 : f32
    %7 = vector.broadcast %cst : f32 to vector<8x128xf32>
    %8 = arith.addf %6, %7 : vector<8x128xf32>
    %9 = arith.subf %3, %5 : vector<8x128xf32>
    %cst_6 = arith.constant 9.99999997E-7 : f32
    %10 = vector.broadcast %cst_6 : f32 to vector<8x128xf32>
    %11 = arith.addf %9, %10 : vector<8x128xf32>
    %12 = arith.mulf %8, %8 : vector<8x128xf32>
    %13 = arith.mulf %11, %11 : vector<8x128xf32>
    %c0_7 = arith.constant 0 : index
    %c0_8 = arith.constant 0 : index
    %14 = vector.load %arg6[%c0_7, %c0_8] : memref<8x1xf32, #tpu.memory_space<vmem>>, vector<8x1xf32>
    %cst_9 = arith.constant dense<0.000000e+00> : vector<8xf32>
    %15 = vector.multi_reduction <add>, %12, %cst_9 [1] : vector<8x128xf32> to vector<8xf32>
    %16 = vector.shape_cast %15 : vector<8xf32> to vector<8x1xf32>
    %17 = arith.addf %14, %16 : vector<8x1xf32>
    %c0_10 = arith.constant 0 : index
    %c0_11 = arith.constant 0 : index
    %18 = vector.load %arg6[%c0_10, %c0_11] : memref<8x1xf32, #tpu.memory_space<vmem>>, vector<8x1xf32>
    tpu.vector_store %arg6[%c0_10, %c0_11], %17 {strides = array<i32>} : memref<8x1xf32, #tpu.memory_space<vmem>>, vector<8x1xf32>,
    %c0_12 = arith.constant 0 : index
    %c0_13 = arith.constant 0 : index
    %19 = vector.load %arg7[%c0_12, %c0_13] : memref<8x1xf32, #tpu.memory_space<vmem>>, vector<8x1xf32>
    %cst_14 = arith.constant dense<0.000000e+00> : vector<8xf32>
    %20 = vector.multi_reduction <add>, %13, %cst_14 [1] : vector<8x128xf32> to vector<8xf32>
    %21 = vector.shape_cast %20 : vector<8xf32> to vector<8x1xf32>
    %22 = arith.addf %19, %21 : vector<8x1xf32>
    %c0_15 = arith.constant 0 : index
    %c0_16 = arith.constant 0 : index
    %23 = vector.load %arg7[%c0_15, %c0_16] : memref<8x1xf32, #tpu.memory_space<vmem>>, vector<8x1xf32>
    tpu.vector_store %arg7[%c0_15, %c0_16], %22 {strides = array<i32>} : memref<8x1xf32, #tpu.memory_space<vmem>>, vector<8x1xf32>,
    %c0_i32_17 = arith.constant 0 : i32
    %24 = arith.cmpi eq, %arg1, %c0_i32_17 : i32
    %25 = arith.extui %24 : i1 to i32
    %c0_i32_18 = arith.constant 0 : i32
    %26 = arith.cmpi ne, %25, %c0_i32_18 : i32
    scf.if %26 {
      %c0_19 = arith.constant 0 : index
      %c0_20 = arith.constant 0 : index
      %27 = vector.load %arg6[%c0_19, %c0_20] : memref<8x1xf32, #tpu.memory_space<vmem>>, vector<8x1xf32>
      %28 = math.sqrt %27 : vector<8x1xf32>
      %c0_21 = arith.constant 0 : index
      %c0_22 = arith.constant 0 : index
      %29 = vector.load %arg7[%c0_21, %c0_22] : memref<8x1xf32, #tpu.memory_space<vmem>>, vector<8x1xf32>
      %30 = math.sqrt %29 : vector<8x1xf32>
      %31 = arith.subf %28, %30 : vector<8x1xf32>
      %cst_23 = arith.constant 2.000000e-01 : f32
      %32 = vector.broadcast %cst_23 : f32 to vector<8x1xf32>
      %33 = arith.addf %31, %32 : vector<8x1xf32>
      %cst_24 = arith.constant 0.000000e+00 : f32
      %34 = vector.broadcast %cst_24 : f32 to vector<8x1xf32>
      %35 = arith.maximumf %33, %34 : vector<8x1xf32>
      %36 = vector.shape_cast %35 : vector<8x1xf32> to vector<1x8x1xf32>
      %cst_25 = arith.constant dense<0.000000e+00> : vector<1xf32>
      %37 = vector.multi_reduction <add>, %36, %cst_25 [1, 2] : vector<1x8x1xf32> to vector<1xf32>
      %38 = vector.shape_cast %37 : vector<1xf32> to vector<1x1x1xf32>
      %39 = vector.extract %38[0, 0, 0] : f32 from vector<1x1x1xf32>
      %40 = tpu.iota {dimensions = array<i32: 1>} : vector<1x8x128xi32>
      %41 = tpu.iota {dimensions = array<i32: 2>} : vector<1x8x128xi32>
      %c0_i32_26 = arith.constant 0 : i32
      %42 = vector.broadcast %c0_i32_26 : i32 to vector<1x8x128xi32>
      %43 = arith.cmpi eq, %40, %42 : vector<1x8x128xi32>
      %c0_i32_27 = arith.constant 0 : i32
      %44 = vector.broadcast %c0_i32_27 : i32 to vector<1x8x128xi32>
      %45 = arith.cmpi eq, %41, %44 : vector<1x8x128xi32>
      %46 = arith.andi %43, %45 : vector<1x8x128xi1>
      %cst_28 = arith.constant 0.000000e+00 : f32
      %47 = vector.broadcast %39 : f32 to vector<1x8x128xf32>
      %48 = vector.broadcast %cst_28 : f32 to vector<1x8x128xf32>
      %49 = arith.select %46, %47, %48 : vector<1x8x128xi1>, vector<1x8x128xf32>
      %c0_29 = arith.constant 0 : index
      %c0_30 = arith.constant 0 : index
      %c0_31 = arith.constant 0 : index
      %50 = vector.load %arg5[%c0_29, %c0_30, %c0_31] : memref<1x8x128xf32, #tpu.memory_space<vmem>>, vector<1x8x128xf32>
      tpu.vector_store %arg5[%c0_29, %c0_30, %c0_31], %49 {strides = array<i32>} : memref<1x8x128xf32, #tpu.memory_space<vmem>>, vector<1x8x128xf32>,
    } else {
    }
    return
  }
  func.func @transform_0(%arg0: i32, %arg1: i32) -> (i32, i32) {
    %c0_i32 = arith.constant 0 : i32
    return %arg0, %arg1 : i32, i32
  }
  func.func @transform_1(%arg0: i32, %arg1: i32) -> (i32, i32) {
    %c0_i32 = arith.constant 0 : i32
    return %arg0, %arg1 : i32, i32
  }
  func.func @transform_2(%arg0: i32, %arg1: i32) -> (i32, i32) {
    %c0_i32 = arith.constant 0 : i32
    return %arg0, %arg1 : i32, i32
  }
  func.func @transform_3(%arg0: i32, %arg1: i32) -> (i32, i32, i32) {
    %c0_i32 = arith.constant 0 : i32
    %c0_i32_0 = arith.constant 0 : i32
    %c0_i32_1 = arith.constant 0 : i32
    return %arg0, %c0_i32, %c0_i32_0 : i32, i32, i32
  }
}

</mosaic_0001>

<llo_original>
// kernel: tpu_custom_call.1
$region0: #{tpu_custom_call.1}
  #allocation0 [shape = 'u32[]', space=smem, size = 0x4, offset = 0x4, fixed_abs, tag = 'smem constant byte address 0x4 - core index']
  #allocation1 [shape = 'u32[144,128]{1,0:T(1,128)}', space=vmem, size = 0x12000, scoped, tag = 'internal scratch']
  #allocation2 [shape = 'f32[8,1]{1,0:T(8,128)}', space=vmem, size = 0x1000, scoped, tag = 'scratch operand']
  #allocation3 [shape = 'f32[8,1]{1,0:T(8,128)}', space=vmem, size = 0x1000, scoped, tag = 'scratch operand']
  %s0 = inlined_call_operand.hbm [shape: f32[8,128], index: 0, kind: input, shape index: {}]
  %s1 = inlined_call_operand.hbm [shape: f32[8,128], index: 1, kind: input, shape index: {}]
  %s2 = inlined_call_operand.hbm [shape: f32[8,128], index: 2, kind: input, shape index: {}]
  %s3 = inlined_call_operand.hbm [shape: f32[1,8,128], index: 3, kind: output, shape index: {}]
  %s4 = sld [smem:[#allocation0]]
  $region42: #{tpu_custom_call.1} parent=0
    _
  %s6 = ssub.s32 1, %s4
  %s7 = scalar_select 0, %s6, %s4
  $region1: #{tpu_custom_call.1} parent=0
    #allocation4 [shape = 'u8[4096]{0}', space=vmem, size = 0x1000, scoped, tag = 'input window, operand 0, single buffered']
    #allocation5 [shape = 's32[1]{0}', space=sflag, size = 0x4, scoped, tag = 'scoped memory for tpu_custom_call.1']
    #allocation6 [shape = 's32[1]{0}', space=sflag, size = 0x4, scoped, tag = 'scoped memory for tpu_custom_call.1']
    #allocation7 [shape = 'u8[4096]{0}', space=vmem, size = 0x1000, scoped, tag = 'input window, operand 1, single buffered']
    #allocation8 [shape = 's32[1]{0}', space=sflag, size = 0x4, scoped, tag = 'scoped memory for tpu_custom_call.1']
    #allocation9 [shape = 'u8[4096]{0}', space=vmem, size = 0x1000, scoped, tag = 'input window, operand 2, single buffered']
    #allocation10 [shape = 'u8[4096]{0}', space=vmem, size = 0x1000, scoped, tag = 'output window, operand 0, single buffered']
    %8 = vsyncpa [#allocation5], 0
    %9 = vsyncpa [#allocation8], 0
    %10 = vsyncpa [#allocation6], 0
    // Predicated region
    $region2: #{tpu_custom_call.1} parent=1 // pred_check
      _
    $region3: #{tpu_custom_call.1} parent=1 // pred_check_branch
      %12 = sbr.rel (0) target = $region5
    $region4: #{tpu_custom_call.1} parent=1 // pred_region
      %s14 = ssub.s32 128, 128
      %15 = vsyncadd [#allocation5], %s14
      %s17 = sshll.u32 [#allocation4], 4
      %s18 = int_to_ptr.vmem [resolvable:$true] %s17
      %20 = dma.hbm_to_vmem [thread:$0]  %s0, 128, %s18, [#allocation5]
    $region5: #{tpu_custom_call.1} parent=1 // pred_fallthru
      _
    // Predicated region
    $region6: #{tpu_custom_call.1} parent=1 // pred_check
      _
    $region7: #{tpu_custom_call.1} parent=1 // pred_check_branch
      %22 = sbr.rel (0) target = $region9
    $region8: #{tpu_custom_call.1} parent=1 // pred_region
      %s24 = ssub.s32 128, 128
      %25 = vsyncadd [#allocation8], %s24
      %s27 = sshll.u32 [#allocation7], 4
      %s28 = int_to_ptr.vmem [resolvable:$true] %s27
      %30 = dma.hbm_to_vmem [thread:$0]  %s1, 128, %s28, [#allocation8]
    $region9: #{tpu_custom_call.1} parent=1 // pred_fallthru
      _
    // Predicated region
    $region10: #{tpu_custom_call.1} parent=1 // pred_check
      _
    $region11: #{tpu_custom_call.1} parent=1 // pred_check_branch
      %32 = sbr.rel (0) target = $region13
    $region12: #{tpu_custom_call.1} parent=1 // pred_region
      %s34 = ssub.s32 128, 128
      %35 = vsyncadd [#allocation8], %s34
      %s37 = sshll.u32 [#allocation9], 4
      %s38 = int_to_ptr.vmem [resolvable:$true] %s37
      %40 = dma.hbm_to_vmem [thread:$0]  %s2, 128, %s38, [#allocation8]
    $region13: #{tpu_custom_call.1} parent=1 // pred_fallthru
      _
    // Predicated region
    $region14: #{tpu_custom_call.1} parent=1 // pred_check
      _
    $region15: #{tpu_custom_call.1} parent=1 // pred_check_branch
      %42 = sbr.rel (0) target = $region17
    $region16: #{tpu_custom_call.1} parent=1 // pred_region
      %43 = dma.done [#allocation5], 128
    $region17: #{tpu_custom_call.1} parent=1 // pred_fallthru
      _
    // Predicated region
    $region18: #{tpu_custom_call.1} parent=1 // pred_check
      _
    $region19: #{tpu_custom_call.1} parent=1 // pred_check_branch
      %45 = sbr.rel (0) target = $region21
    $region20: #{tpu_custom_call.1} parent=1 // pred_region
      %46 = dma.done [#allocation8], 128
    $region21: #{tpu_custom_call.1} parent=1 // pred_fallthru
      _
    // Predicated region
    $region22: #{tpu_custom_call.1} parent=1 // pred_check
      _
    $region23: #{tpu_custom_call.1} parent=1 // pred_check_branch
      %48 = sbr.rel (0) target = $region25
    $region24: #{tpu_custom_call.1} parent=1 // pred_region
      %49 = dma.done [#allocation8], 128
    $region25: #{tpu_custom_call.1} parent=1 // pred_fallthru
      _
    %p50 = scmp.eq.s32.totalorder 0, 0
    // Predicated region
    $region26: #{tpu_custom_call.1} parent=1 // pred_check
      %p51 = pneg %p50
    $region27: #{tpu_custom_call.1} parent=1 // pred_check_branch
      %53 = sbr.rel (%p51) target = $region29
    $region28: #{tpu_custom_call.1} parent=1 // pred_region
      %vm54 = vcmask 7168
      %55 = vst.msk [vmem:[#allocation2] sm:$0xff] %vm54, 0.0
      %56 = vst.msk [vmem:[#allocation3] sm:$0xff] %vm54, 0.0
    $region29: #{tpu_custom_call.1} parent=1 // pred_fallthru
      _
    %v57 = vld [vmem:[#allocation4] sm:$0xff]
    %v58 = vld [vmem:[#allocation7] sm:$0xff]
    %v59 = vld [vmem:[#allocation9] sm:$0xff]
    %v60 = vsub.f32 %v57, %v58
    %v61 = vadd.f32 %v60, 1e-06
    %v62 = vsub.f32 %v57, %v59
    %v63 = vadd.f32 %v62, 1e-06
    %v64 = vmul.f32 %v61, %v61
    %v65 = vmul.f32 %v63, %v63
    %v66 = vld [vmem:[#allocation2] sm:$0xff]
    %67 = vadd.xlane.f32.xlu0 %v64
    %v68 = vpop.xlane.xlu0 %67
    %v69 = vadd.f32 %v66, %v68
    %vm70 = vcmask 7168
    %71 = vst.msk [vmem:[#allocation2] sm:$0xff] %vm70, %v69
    %v72 = vld [vmem:[#allocation3] sm:$0xff]
    %73 = vadd.xlane.f32.xlu0 %v65
    %v74 = vpop.xlane.xlu0 %73
    %v75 = vadd.f32 %v72, %v74
    %76 = vst.msk [vmem:[#allocation3] sm:$0xff] %vm70, %v75
    // Predicated region
    $region30: #{tpu_custom_call.1} parent=1 // pred_check
      %p77 = pneg %p50
    $region31: #{tpu_custom_call.1} parent=1 // pred_check_branch
      %79 = sbr.rel (%p77) target = $region33
    $region32: #{tpu_custom_call.1} parent=1 // pred_region
      %v80 = vld [vmem:[#allocation2] sm:$0xff]
      %v81 = vrsqrt.pop %v80
      %v82 = vmul.f32 %v80, %v81
      %vm83 = vcmp.eq.f32.partialorder %v80, inf
      %v84 = vsel %vm83, %v80, %v82
      %vm85 = vcmp.eq.f32.partialorder %v80, 0.0
      %v86 = vand.u32 %v80, 2147483648
      %v87 = vsel %vm85, %v86, %v84
      %v88 = vld [vmem:[#allocation3] sm:$0xff]
      %v89 = vrsqrt.pop %v88
      %v90 = vmul.f32 %v88, %v89
      %vm91 = vcmp.eq.f32.partialorder %v88, inf
      %v92 = vsel %vm91, %v88, %v90
      %vm93 = vcmp.eq.f32.partialorder %v88, 0.0
      %v94 = vand.u32 %v88, 2147483648
      %v95 = vsel %vm93, %v94, %v92
      %v96 = vsub.f32 %v87, %v95
      %v97 = vadd.f32 %v96, 0.2
      %v98 = vmax.f32 %v97, 0.0
      %v99 = vsel %vm70, %v98, 0.0
      %100 = vadd.xlane.f32.xlu0 %v99
      %v101 = vpop.xlane.xlu0 %100
      %v102 = vrot.slane %v101, 4
      %v103 = vadd.f32 %v101, %v102
      %v104 = vrot.slane %v103, 2
      %v105 = vadd.f32 %v103, %v104
      %v106 = vrot.slane %v105, 1
      %v107 = vadd.f32 %v105, %v106
      %s108 = vtos %v107
      %v109 = vlaneseq
      %v110 = vshrl.u32 %v109, 7
      %v111 = vlaneseq
      %v112 = vand.u32 %v111, 127
      %vm113 = vcmp.eq.s32.totalorder %v110, 0
      %vm114 = vcmp.eq.s32.totalorder %v112, 0
      %vm115 = vmand %vm113, %vm114
      %v116 = vstv %s108
      %v117 = vsel %vm115, %v116, 0.0
      %118 = vst [vmem:[#allocation10] sm:$0xff] %v117
    $region33: #{tpu_custom_call.1} parent=1 // pred_fallthru
      _
    // Predicated region
    $region34: #{tpu_custom_call.1} parent=1 // pred_check
      _
    $region35: #{tpu_custom_call.1} parent=1 // pred_check_branch
      %120 = sbr.rel (0) target = $region37
    $region36: #{tpu_custom_call.1} parent=1 // pred_region
      %s122 = ssub.s32 128, 128
      %123 = vsyncadd [#allocation6], %s122
      %s125 = sshll.u32 [#allocation10], 4
      %s126 = int_to_ptr.vmem [resolvable:$true] %s125
      %128 = dma.vmem_to_hbm [thread:$0]  %s126, 128, %s3, [#allocation6]
    $region37: #{tpu_custom_call.1} parent=1 // pred_fallthru
      _
    // Predicated region
    $region38: #{tpu_custom_call.1} parent=1 // pred_check
      _
    $region39: #{tpu_custom_call.1} parent=1 // pred_check_branch
      %130 = sbr.rel (0) target = $region41
    $region40: #{tpu_custom_call.1} parent=1 // pred_region
      %131 = dma.done [#allocation6], 128
    $region41: #{tpu_custom_call.1} parent=1 // pred_fallthru
      _
    %132 = vsyncpa [#allocation5], 1
    %133 = vsyncpa [#allocation8], 1
    %134 = vsyncpa [#allocation6], 1

</llo_original>
